<compile_context>
chip_gen: v6e
topology: v6e:2x2x1
jax: 0.10.0
libtpu: 0.0.40
codegen_flags: <defaults>
</compile_context>

<pallas_src>
import numpy as np

import jax
import jax.numpy as jnp
from jax.experimental import pallas as pl
from jax.experimental.pallas import tpu as pltpu


# ----------------------------------------------------------------------------
# Host-side parameter sampling (mirrors torch.randint(...).item(); no device sync)
# ----------------------------------------------------------------------------
def _sample_params(rng: np.random.Generator, h: int, w: int, size: int):
    s_min = min(h, w)
    lo_h = 3 * (h - s_min) // 8
    hi_h = max(lo_h + 1, 5 * (h - s_min) // 8)
    lo_w = 3 * (w - s_min) // 8
    hi_w = max(lo_w + 1, 5 * (w - s_min) // 8)
    t_max = max(min(s_min, round(9 / 8 * size)), size)
    off_h = int(rng.integers(lo_h, hi_h))          # high exclusive, like torch.randint
    off_w = int(rng.integers(lo_w, hi_w))
    t = int(rng.integers(size, t_max + 1))
    return off_h, off_w, t, s_min


# ----------------------------------------------------------------------------
# Device-side interpolation-matrix construction (crop offset folded in)
# ----------------------------------------------------------------------------
def _bilinear_matrix(t: int, in_size: int, off: int, n_cols: int,
                     n_rows_pad: int, dtype) -> jnp.ndarray:
    """(n_rows_pad, n_cols) 1-D bilinear resize matrix, align_corners=False,
    with the crop offset `off` folded into the column indices. Rows >= t are 0."""
    i = jnp.arange(t, dtype=jnp.float32)
    scale = jnp.float32(in_size / t)
    src = (i + 0.5) * scale - 0.5
    i0f = jnp.floor(src)
    frac = src - i0f
    i0 = jnp.clip(i0f.astype(jnp.int32), 0, in_size - 1) + off
    i1 = jnp.clip(i0f.astype(jnp.int32) + 1, 0, in_size - 1) + off
    m = (jax.nn.one_hot(i0, n_cols, dtype=jnp.float32) * (1.0 - frac)[:, None]
         + jax.nn.one_hot(i1, n_cols, dtype=jnp.float32) * frac[:, None])
    if n_rows_pad > t:
        m = jnp.pad(m, ((0, n_rows_pad - t), (0, 0)))
    return m.astype(dtype)


# ----------------------------------------------------------------------------
# Kernel
# ----------------------------------------------------------------------------
def _make_kernel(ah_first: bool, n_channels: int):
    def kernel(x_ref, ah_ref, awt_ref, o_ref, z_ref):
        # x_ref:   (C, TH, W)      compute dtype  — one H tile of the image
        # ah_ref:  (Tt, TH)        compute dtype  — row-resize tile, crop folded in
        # awt_ref: (W, t_pad)      compute dtype  — pre-transposed col-resize, resident
        # o_ref:   (C, Tt, t_pad)  f32            — resident across the H-reduction axis
        # z_ref:   VMEM scratch                   — single intermediate reused per channel
        @pl.when(pl.program_id(1) == 0)
        def _init():
            o_ref[...] = jnp.zeros_like(o_ref)

        ah = ah_ref[...]
        awt = awt_ref[...]
        for c in range(n_channels):
            if ah_first:
                # contract the (tiled) H axis first: (Tt,TH)@(TH,W) -> (Tt,W)
                z_ref[...] = jnp.dot(
                    ah, x_ref[c], preferred_element_type=jnp.float32
                ).astype(z_ref.dtype)
                o_ref[c, :, :] += jnp.dot(
                    z_ref[...], awt, preferred_element_type=jnp.float32)
            else:
                # contract W first: (TH,W)@(W,t_pad) -> (TH,t_pad)
                z_ref[...] = jnp.dot(
                    x_ref[c], awt, preferred_element_type=jnp.float32
                ).astype(z_ref.dtype)
                o_ref[c, :, :] += jnp.dot(
                    ah, z_ref[...], preferred_element_type=jnp.float32)
    return kernel


# ----------------------------------------------------------------------------
# Wrapper
# ----------------------------------------------------------------------------
def _crop_resize(img: jnp.ndarray, off_h: int, off_w: int, t: int, s_min: int,
                 *, tile_h: int = 256, compute_dtype=jnp.bfloat16) -> jnp.ndarray:
    C, H, W = img.shape

    # ---- tiling decisions (static, from shapes only) -----------------------
    tile_h = max(128, (int(tile_h) // 128) * 128)     # A_h blocks must be lane-aligned
    if H <= tile_h:
        TH, H_pad = H, H                              # single H tile (small images)
    else:
        TH = tile_h
        H_pad = ((H + TH - 1) // TH) * TH             # pad so the grid tiles evenly
    n_h = H_pad // TH

    n_t = 2 if t >= 16 else 1                         # "parallel" axis for v7x megacore
    Tt = ((t + 8 * n_t - 1) // (8 * n_t)) * 8         # sublane-aligned output-row tile
    t_rows_pad = Tt * n_t
    t_pad = max(128, ((t + 127) // 128) * 128)        # lane-dense unmasked output stores

    # adaptive matmul order: FLOPs per H tile per channel
    ah_first = Tt * W * (TH + t_pad) <= TH * t_pad * (W + Tt)

    # ---- operands (built on device; no host round trip) --------------------
    a_h = _bilinear_matrix(t, s_min, off_h, H_pad, t_rows_pad, compute_dtype)  # (t_rows_pad, H_pad)
    a_w = _bilinear_matrix(t, s_min, off_w, W, t, jnp.float32)                 # (t, W)
    a_wt = jnp.pad(a_w.T, ((0, 0), (0, t_pad - t))).astype(compute_dtype)      # (W, t_pad)

    x = img.astype(compute_dtype)
    if H_pad != H:
        # zero rows multiply zero A_h columns -> exact; keeps the grid rectangular
        x = jnp.pad(x, ((0, 0), (0, H_pad - H), (0, 0)))

    kernel = _make_kernel(ah_first, C)
    z_shape = (Tt, W) if ah_first else (TH, t_pad)

    out_pad = pl.pallas_call(
        kernel,
        out_shape=jax.ShapeDtypeStruct((C, t_rows_pad, t_pad), jnp.float32),
        grid_spec=pltpu.PrefetchScalarGridSpec(
            num_scalar_prefetch=0,
            grid=(n_t, n_h),
            in_specs=[
                pl.BlockSpec((C, TH, W), lambda i, k: (0, k, 0)),   # image H tile
                pl.BlockSpec((Tt, TH), lambda i, k: (i, k)),        # A_h tile
                pl.BlockSpec((W, t_pad), lambda i, k: (0, 0)),      # A_w^T (resident)
            ],
            out_specs=pl.BlockSpec((C, Tt, t_pad), lambda i, k: (0, i, 0)),
            scratch_shapes=[pltpu.VMEM(z_shape, compute_dtype)],
        ),
        compiler_params=pltpu.CompilerParams(
            # t-row tiles are independent (megacore); H tiles are a reduction.
            dimension_semantics=("parallel", "arbitrary"),
            # Cap, not reservation: above v5e's 16 MiB default, below v7x's
            # 64 MiB physical VMEM. Actual per-step working set with the default
            # tile_h=256 stays far below this for typical image widths.
            vmem_limit_bytes=48 * 1024 * 1024,
        ),
    )(x, a_h, a_wt)

    # TODO(synk): extra HBM copy — fuse into the consumer / donate in a pipeline.
    return out_pad[:, :t, :t]


def augmentation_dalle(img: jnp.ndarray, size: int, seed: int,
                       *, tile_h: int = 256,
                       compute_dtype=jnp.bfloat16) -> jnp.ndarray:
    """img: float32 [C, H, W] (CHW, like PyTorch). Returns float32 [C, t, t]."""
    C, H, W = img.shape
    rng = np.random.default_rng(seed)
    off_h, off_w, t, s_min = _sample_params(rng, H, W, size)
    return _crop_resize(img, off_h, off_w, t, s_min,
                        tile_h=tile_h, compute_dtype=compute_dtype)


# ----------------------------------------------------------------------------
# Pure-JAX f32 reference (same crop+bilinear math, no tiling/padding)
# ----------------------------------------------------------------------------
def _reference(img, off_h, off_w, t, s_min):
    C, H, W = img.shape
    a_h = _bilinear_matrix(t, s_min, off_h, H, t, jnp.float32)   # (t, H)
    a_w = _bilinear_matrix(t, s_min, off_w, W, t, jnp.float32)   # (t, W)
    return jnp.einsum("th,chw,vw->ctv", a_h, img, a_w,
                      precision=jax.lax.Precision.HIGHEST)


if __name__ == "__main__":
    key = jax.random.PRNGKey(0)
    k1, k2 = jax.random.split(key)

    # --- Test 1: small image, single H tile, f32 compute path ---------------
    C, H, W = 3, 20, 16
    size = 8
    seed = 0
    img = jax.random.uniform(k1, (C, H, W), dtype=jnp.float32)
    out = jax.block_until_ready(
        augmentation_dalle(img, size, seed, compute_dtype=jnp.float32))
    off_h, off_w, t, s_min = _sample_params(np.random.default_rng(seed), H, W, size)
    ref = _reference(img, off_h, off_w, t, s_min)
    assert out.shape == (C, t, t), (out.shape, (C, t, t))
    assert jnp.allclose(out, ref, atol=1e-3, rtol=1e-3), \
        float(jnp.max(jnp.abs(out - ref)))

    # --- Test 2: H-tiled reduction grid + parallel t tiles, bf16 MXU path ---
    C, H, W = 3, 272, 200          # H > tile_h -> 3 H-tiles; non-square -> row crop
    size = 64
    seed = 1
    img = jax.random.uniform(k2, (C, H, W), dtype=jnp.float32)
    out = jax.block_until_ready(
        augmentation_dalle(img, size, seed, tile_h=128))        # bf16 default
    off_h, off_w, t, s_min = _sample_params(np.random.default_rng(seed), H, W, size)
    ref = _reference(img, off_h, off_w, t, s_min)
    assert out.shape == (C, t, t), (out.shape, (C, t, t))
    # bf16 inputs + bf16-rounded intermediate -> relaxed tolerance (values in [0,1]).
    assert jnp.allclose(out, ref, atol=3e-2, rtol=3e-2), \
        float(jnp.max(jnp.abs(out - ref)))

    print("KERNEL_OK")
</pallas_src>

<mosaic_0001>
module attributes {stable_mosaic.version = 11 : i64} {
  func.func @kernel(%arg0: i32, %arg1: i32, %arg2: memref<3x20x16xf32, #tpu.memory_space<vmem>>, %arg3: memref<16x20xf32, #tpu.memory_space<vmem>>, %arg4: memref<16x128xf32, #tpu.memory_space<vmem>>, %arg5: memref<3x16x128xf32, #tpu.memory_space<vmem>>, %arg6: memref<16x16xf32, #tpu.memory_space<vmem>>) attributes {dimension_semantics = [#tpu.dimension_semantics<parallel>, #tpu.dimension_semantics<arbitrary>], iteration_bounds = array<i64: 1, 1>, scalar_prefetch = 0 : i64, scratch_operands = 1 : i64, tpu.core_type = #tpu.core_type<tc>, window_params = [{transform_indices = @transform_0, window_bounds = array<i64: 3, 20, 16>}, {transform_indices = @transform_1, window_bounds = array<i64: 16, 20>}, {pipeline_mode = #tpu.pipeline_mode<synchronous>, transform_indices = @transform_2, window_bounds = array<i64: 16, 128>}, {transform_indices = @transform_3, window_bounds = array<i64: 3, 16, 128>}]} {
    %c0_i32 = arith.constant 0 : i32
    %0 = arith.cmpi eq, %arg1, %c0_i32 : i32
    %1 = arith.extui %0 : i1 to i32
    %c0_i32_0 = arith.constant 0 : i32
    %2 = arith.cmpi ne, %1, %c0_i32_0 : i32
    scf.if %2 {
      %cst_46 = arith.constant 0.000000e+00 : f32
      %41 = vector.broadcast %cst_46 : f32 to vector<3x16x128xf32>
      %c0_47 = arith.constant 0 : index
      %c0_48 = arith.constant 0 : index
      %c0_49 = arith.constant 0 : index
      %42 = vector.load %arg5[%c0_47, %c0_48, %c0_49] : memref<3x16x128xf32, #tpu.memory_space<vmem>>, vector<3x16x128xf32>
      tpu.vector_store %arg5[%c0_47, %c0_48, %c0_49], %41 {strides = array<i32>} : memref<3x16x128xf32, #tpu.memory_space<vmem>>, vector<3x16x128xf32>,
    } else {
    }
    %c0 = arith.constant 0 : index
    %c0_1 = arith.constant 0 : index
    %3 = vector.load %arg3[%c0, %c0_1] : memref<16x20xf32, #tpu.memory_space<vmem>>, vector<16x20xf32>
    %c0_2 = arith.constant 0 : index
    %c0_3 = arith.constant 0 : index
    %4 = vector.load %arg4[%c0_2, %c0_3] : memref<16x128xf32, #tpu.memory_space<vmem>>, vector<16x128xf32>
    %c0_4 = arith.constant 0 : index
    %c0_5 = arith.constant 0 : index
    %c0_6 = arith.constant 0 : index
    %5 = vector.load %arg2[%c0_4, %c0_5, %c0_6] : memref<3x20x16xf32, #tpu.memory_space<vmem>>, vector<1x20x16xf32>
    %6 = vector.shape_cast %5 : vector<1x20x16xf32> to vector<20x16xf32>
    %cst = arith.constant dense<0.000000e+00> : vector<16x16xf32>
    %7 = tpu.matmul %3, %6, %cst {dimension_numbers = #tpu.dot_dimension_numbers<[1], [0], [0], [1], [0, 0, 1, 1], [], []>} : vector<16x20xf32>, vector<20x16xf32>, vector<16x16xf32> -> vector<16x16xf32>
    %c0_7 = arith.constant 0 : index
    %c0_8 = arith.constant 0 : index
    %8 = vector.load %arg6[%c0_7, %c0_8] : memref<16x16xf32, #tpu.memory_space<vmem>>, vector<16x16xf32>
    tpu.vector_store %arg6[%c0_7, %c0_8], %7 {strides = array<i32>} : memref<16x16xf32, #tpu.memory_space<vmem>>, vector<16x16xf32>,
    %c0_9 = arith.constant 0 : index
    %c0_10 = arith.constant 0 : index
    %c0_11 = arith.constant 0 : index
    %9 = vector.load %arg5[%c0_9, %c0_10, %c0_11] : memref<3x16x128xf32, #tpu.memory_space<vmem>>, vector<1x16x128xf32>
    %10 = vector.shape_cast %9 : vector<1x16x128xf32> to vector<16x128xf32>
    %c0_12 = arith.constant 0 : index
    %c0_13 = arith.constant 0 : index
    %11 = vector.load %arg6[%c0_12, %c0_13] : memref<16x16xf32, #tpu.memory_space<vmem>>, vector<16x16xf32>
    %cst_14 = arith.constant dense<0.000000e+00> : vector<16x128xf32>
    %12 = tpu.matmul %11, %4, %cst_14 {dimension_numbers = #tpu.dot_dimension_numbers<[1], [0], [0], [1], [0, 0, 1, 1], [], []>} : vector<16x16xf32>, vector<16x128xf32>, vector<16x128xf32> -> vector<16x128xf32>
    %13 = arith.addf %10, %12 : vector<16x128xf32>
    %c0_15 = arith.constant 0 : index
    %c0_16 = arith.constant 0 : index
    %c0_17 = arith.constant 0 : index
    %14 = vector.load %arg5[%c0_15, %c0_16, %c0_17] : memref<3x16x128xf32, #tpu.memory_space<vmem>>, vector<1x16x128xf32>
    %15 = vector.shape_cast %14 : vector<1x16x128xf32> to vector<16x128xf32>
    %16 = vector.shape_cast %13 : vector<16x128xf32> to vector<1x16x128xf32>
    tpu.vector_store %arg5[%c0_15, %c0_16, %c0_17], %16 {strides = array<i32>} : memref<3x16x128xf32, #tpu.memory_space<vmem>>, vector<1x16x128xf32>,
    %c1 = arith.constant 1 : index
    %c0_18 = arith.constant 0 : index
    %c0_19 = arith.constant 0 : index
    %17 = vector.load %arg2[%c1, %c0_18, %c0_19] : memref<3x20x16xf32, #tpu.memory_space<vmem>>, vector<1x20x16xf32>
    %18 = vector.shape_cast %17 : vector<1x20x16xf32> to vector<20x16xf32>
    %cst_20 = arith.constant dense<0.000000e+00> : vector<16x16xf32>
    %19 = tpu.matmul %3, %18, %cst_20 {dimension_numbers = #tpu.dot_dimension_numbers<[1], [0], [0], [1], [0, 0, 1, 1], [], []>} : vector<16x20xf32>, vector<20x16xf32>, vector<16x16xf32> -> vector<16x16xf32>
    %c0_21 = arith.constant 0 : index
    %c0_22 = arith.constant 0 : index
    %20 = vector.load %arg6[%c0_21, %c0_22] : memref<16x16xf32, #tpu.memory_space<vmem>>, vector<16x16xf32>
    tpu.vector_store %arg6[%c0_21, %c0_22], %19 {strides = array<i32>} : memref<16x16xf32, #tpu.memory_space<vmem>>, vector<16x16xf32>,
    %c1_23 = arith.constant 1 : index
    %c0_24 = arith.constant 0 : index
    %c0_25 = arith.constant 0 : index
    %21 = vector.load %arg5[%c1_23, %c0_24, %c0_25] : memref<3x16x128xf32, #tpu.memory_space<vmem>>, vector<1x16x128xf32>
    %22 = vector.shape_cast %21 : vector<1x16x128xf32> to vector<16x128xf32>
    %c0_26 = arith.constant 0 : index
    %c0_27 = arith.constant 0 : index
    %23 = vector.load %arg6[%c0_26, %c0_27] : memref<16x16xf32, #tpu.memory_space<vmem>>, vector<16x16xf32>
    %cst_28 = arith.constant dense<0.000000e+00> : vector<16x128xf32>
    %24 = tpu.matmul %23, %4, %cst_28 {dimension_numbers = #tpu.dot_dimension_numbers<[1], [0], [0], [1], [0, 0, 1, 1], [], []>} : vector<16x16xf32>, vector<16x128xf32>, vector<16x128xf32> -> vector<16x128xf32>
    %25 = arith.addf %22, %24 : vector<16x128xf32>
    %c1_29 = arith.constant 1 : index
    %c0_30 = arith.constant 0 : index
    %c0_31 = arith.constant 0 : index
    %26 = vector.load %arg5[%c1_29, %c0_30, %c0_31] : memref<3x16x128xf32, #tpu.memory_space<vmem>>, vector<1x16x128xf32>
    %27 = vector.shape_cast %26 : vector<1x16x128xf32> to vector<16x128xf32>
    %28 = vector.shape_cast %25 : vector<16x128xf32> to vector<1x16x128xf32>
    tpu.vector_store %arg5[%c1_29, %c0_30, %c0_31], %28 {strides = array<i32>} : memref<3x16x128xf32, #tpu.memory_space<vmem>>, vector<1x16x128xf32>,
    %c2 = arith.constant 2 : index
    %c0_32 = arith.constant 0 : index
    %c0_33 = arith.constant 0 : index
    %29 = vector.load %arg2[%c2, %c0_32, %c0_33] : memref<3x20x16xf32, #tpu.memory_space<vmem>>, vector<1x20x16xf32>
    %30 = vector.shape_cast %29 : vector<1x20x16xf32> to vector<20x16xf32>
    %cst_34 = arith.constant dense<0.000000e+00> : vector<16x16xf32>
    %31 = tpu.matmul %3, %30, %cst_34 {dimension_numbers = #tpu.dot_dimension_numbers<[1], [0], [0], [1], [0, 0, 1, 1], [], []>} : vector<16x20xf32>, vector<20x16xf32>, vector<16x16xf32> -> vector<16x16xf32>
    %c0_35 = arith.constant 0 : index
    %c0_36 = arith.constant 0 : index
    %32 = vector.load %arg6[%c0_35, %c0_36] : memref<16x16xf32, #tpu.memory_space<vmem>>, vector<16x16xf32>
    tpu.vector_store %arg6[%c0_35, %c0_36], %31 {strides = array<i32>} : memref<16x16xf32, #tpu.memory_space<vmem>>, vector<16x16xf32>,
    %c2_37 = arith.constant 2 : index
    %c0_38 = arith.constant 0 : index
    %c0_39 = arith.constant 0 : index
    %33 = vector.load %arg5[%c2_37, %c0_38, %c0_39] : memref<3x16x128xf32, #tpu.memory_space<vmem>>, vector<1x16x128xf32>
    %34 = vector.shape_cast %33 : vector<1x16x128xf32> to vector<16x128xf32>
    %c0_40 = arith.constant 0 : index
    %c0_41 = arith.constant 0 : index
    %35 = vector.load %arg6[%c0_40, %c0_41] : memref<16x16xf32, #tpu.memory_space<vmem>>, vector<16x16xf32>
    %cst_42 = arith.constant dense<0.000000e+00> : vector<16x128xf32>
    %36 = tpu.matmul %35, %4, %cst_42 {dimension_numbers = #tpu.dot_dimension_numbers<[1], [0], [0], [1], [0, 0, 1, 1], [], []>} : vector<16x16xf32>, vector<16x128xf32>, vector<16x128xf32> -> vector<16x128xf32>
    %37 = arith.addf %34, %36 : vector<16x128xf32>
    %c2_43 = arith.constant 2 : index
    %c0_44 = arith.constant 0 : index
    %c0_45 = arith.constant 0 : index
    %38 = vector.load %arg5[%c2_43, %c0_44, %c0_45] : memref<3x16x128xf32, #tpu.memory_space<vmem>>, vector<1x16x128xf32>
    %39 = vector.shape_cast %38 : vector<1x16x128xf32> to vector<16x128xf32>
    %40 = vector.shape_cast %37 : vector<16x128xf32> to vector<1x16x128xf32>
    tpu.vector_store %arg5[%c2_43, %c0_44, %c0_45], %40 {strides = array<i32>} : memref<3x16x128xf32, #tpu.memory_space<vmem>>, vector<1x16x128xf32>,
    return
  }
  func.func @transform_0(%arg0: i32, %arg1: i32) -> (i32, i32, i32) {
    %c0_i32 = arith.constant 0 : i32
    %c0_i32_0 = arith.constant 0 : i32
    %c0_i32_1 = arith.constant 0 : i32
    return %c0_i32, %arg1, %c0_i32_0 : i32, i32, i32
  }
  func.func @transform_1(%arg0: i32, %arg1: i32) -> (i32, i32) {
    %c0_i32 = arith.constant 0 : i32
    return %arg0, %arg1 : i32, i32
  }
  func.func @transform_2(%arg0: i32, %arg1: i32) -> (i32, i32) {
    %c0_i32 = arith.constant 0 : i32
    %c0_i32_0 = arith.constant 0 : i32
    %c0_i32_1 = arith.constant 0 : i32
    return %c0_i32, %c0_i32_0 : i32, i32
  }
  func.func @transform_3(%arg0: i32, %arg1: i32) -> (i32, i32, i32) {
    %c0_i32 = arith.constant 0 : i32
    %c0_i32_0 = arith.constant 0 : i32
    %c0_i32_1 = arith.constant 0 : i32
    return %c0_i32, %arg0, %c0_i32_0 : i32, i32, i32
  }
}

</mosaic_0001>

<llo_original>
// kernel: tpu_custom_call.1
$region0: #{tpu_custom_call.1}
  #allocation0 [shape = 'u32[]', space=smem, size = 0x4, offset = 0x4, fixed_abs, tag = 'smem constant byte address 0x4 - core index']
  #allocation1 [shape = 'u32[144,128]{1,0:T(1,128)}', space=vmem, size = 0x12000, scoped, tag = 'internal scratch']
  #allocation2 [shape = 'f32[16,16]{1,0:T(8,128)}', space=vmem, size = 0x2000, scoped, tag = 'scratch operand']
  %s0 = inlined_call_operand.vmem [shape: f32[3,20,16], index: 0, kind: input, shape index: {}]
  %s1 = inlined_call_operand.vmem [shape: f32[16,20], index: 1, kind: input, shape index: {}]
  %s2 = inlined_call_operand.vmem [shape: f32[16,128], index: 2, kind: input, shape index: {}]
  %s3 = inlined_call_operand.hbm [shape: f32[3,16,128], index: 3, kind: output, shape index: {}]
  %s4 = sld [smem:[#allocation0]]
  $region26: #{tpu_custom_call.1} parent=0
    _
  %s6 = ssub.s32 1, %s4
  %s7 = scalar_select 0, %s6, %s4
  $region1: #{tpu_custom_call.1} parent=0
    #allocation3 [shape = 'u8[24576]{0}', space=vmem, size = 0x6000, scoped, tag = 'output window, operand 0, single buffered']
    #allocation4 [shape = 's32[1]{0}', space=sflag, size = 0x4, scoped, tag = 'scoped memory for tpu_custom_call.1']
    %8 = vsyncpa [#allocation4], 0
    // Predicated region
    $region2: #{tpu_custom_call.1} parent=1 // pred_check
      _
    $region3: #{tpu_custom_call.1} parent=1 // pred_check_branch
      %10 = sbr.rel (0) target = $region5
    $region4: #{tpu_custom_call.1} parent=1 // pred_region
      _
    $region5: #{tpu_custom_call.1} parent=1 // pred_fallthru
      _
    // Predicated region
    $region6: #{tpu_custom_call.1} parent=1 // pred_check
      _
    $region7: #{tpu_custom_call.1} parent=1 // pred_check_branch
      %12 = sbr.rel (0) target = $region9
    $region8: #{tpu_custom_call.1} parent=1 // pred_region
      _
    $region9: #{tpu_custom_call.1} parent=1 // pred_fallthru
      _
    // Predicated region
    $region10: #{tpu_custom_call.1} parent=1 // pred_check
      _
    $region11: #{tpu_custom_call.1} parent=1 // pred_check_branch
      %14 = sbr.rel (0) target = $region13
    $region12: #{tpu_custom_call.1} parent=1 // pred_region
      _
    $region13: #{tpu_custom_call.1} parent=1 // pred_fallthru
      _
    %p15 = scmp.eq.s32.totalorder 0, 0
    // Predicated region
    $region14: #{tpu_custom_call.1} parent=1 // pred_check
      %p16 = pneg %p15
    $region15: #{tpu_custom_call.1} parent=1 // pred_check_branch
      %18 = sbr.rel (%p16) target = $region17
    $region16: #{tpu_custom_call.1} parent=1 // pred_region
      %19 = vst [vmem:[#allocation3] sm:$0xff] 0.0
      %20 = vst [vmem:[#allocation3 + $0x8] sm:$0xff] 0.0
      %21 = vst [vmem:[#allocation3 + $0x10] sm:$0xff] 0.0
      %22 = vst [vmem:[#allocation3 + $0x18] sm:$0xff] 0.0
      %23 = vst [vmem:[#allocation3 + $0x20] sm:$0xff] 0.0
      %24 = vst [vmem:[#allocation3 + $0x28] sm:$0xff] 0.0
    $region17: #{tpu_custom_call.1} parent=1 // pred_fallthru
      _
    %v25 = vld [vmem:[%s1] sm:$0xff]
    %v26 = vld [vmem:[%s1 + $0x8] sm:$0xff]
    %v27 = vld [vmem:[%s2] sm:$0xff]
    %v28 = vld [vmem:[%s2 + $0x8] sm:$0xff]
    %v29 = vld [vmem:[%s0] sm:$0xff]
    %v30 = vld [vmem:[%s0 + $0x8] sm:$0xff]
    %v31 = vld [vmem:[%s0 + $0x10] sm:$0xf]
    %vm32 = vcmask 162816
    %v34 = vsel %vm32, %v25, 0
    %v37 = vsel %vm32, %v26, 0
    %vm39 = vcmask 1043456
    %v41 = vsel %vm39, %v31, 0
    %43 = vmatprep.subr.mxu0 0.0
    %44 = vmatpush1.msra.mxu0 0.0
    %45 = vmatprep.subr.mxu0 0.0
    %46 = vmatpush1.msra.mxu0 0.0
    %47 = vmatprep.subr.mxu0 0.0
    %48 = vmatpush1.msra.mxu0 0.0
    %49 = vmatprep.subr.mxu0 0.0
    %50 = vmatpush1.msra.mxu0 0.0
    %51 = vmatprep.subr.mxu0 0.0
    %52 = vmatpush1.msra.mxu0 0.0
    %53 = vmatprep.subr.mxu0 0.0
    %54 = vmatpush1.msra.mxu0 0.0
    %55 = vmatprep.subr.mxu0 0.0
    %56 = vmatpush1.msra.mxu0 0.0
    %57 = vmatprep.subr.mxu0 0.0
    %58 = vmatpush1.msra.mxu0 0.0
    %59 = vmatprep.subr.mxu0 0.0
    %60 = vmatpush1.msra.mxu0 0.0
    %61 = vmatprep.subr.mxu0 0.0
    %62 = vmatpush1.msra.mxu0 0.0
    %63 = vmatprep.subr.mxu0 0.0
    %64 = vmatpush1.msra.mxu0 0.0
    %65 = vmatprep.subr.mxu0 0.0
    %66 = vmatpush1.msra.mxu0 0.0
    %67 = vmatprep.subr.mxu0 0.0
    %68 = vmatpush1.msra.mxu0 0.0
    %69 = vmatprep.subr.mxu0 0.0
    %70 = vmatpush1.msra.mxu0 %v41
    %71 = vmatprep.subr.mxu0 0.0
    %72 = vmatpush1.msra.mxu0 %v30
    %73 = vmatprep.subr.mxu0 0.0
    %74 = vmatpush1.msra.mxu0 %v29
    %75 = vmatprep.subr.mxu0 0.0
    %76 = vmatpush2.msra.mxu0 0.0
    %77 = vmatprep.subr.mxu0 0.0
    %78 = vmatpush2.msra.mxu0 0.0
    %79 = vmatprep.subr.mxu0 0.0
    %80 = vmatpush2.msra.mxu0 0.0
    %81 = vmatprep.subr.mxu0 0.0
    %82 = vmatpush2.msra.mxu0 0.0
    %83 = vmatprep.subr.mxu0 0.0
    %84 = vmatpush2.msra.mxu0 0.0
    %85 = vmatprep.subr.mxu0 0.0
    %86 = vmatpush2.msra.mxu0 0.0
    %87 = vmatprep.subr.mxu0 0.0
    %88 = vmatpush2.msra.mxu0 0.0
    %89 = vmatprep.subr.mxu0 0.0
    %90 = vmatpush2.msra.mxu0 0.0
    %91 = vmatprep.subr.mxu0 0.0
    %92 = vmatpush2.msra.mxu0 0.0
    %93 = vmatprep.subr.mxu0 0.0
    %94 = vmatpush2.msra.mxu0 0.0
    %95 = vmatprep.subr.mxu0 0.0
    %96 = vmatpush2.msra.mxu0 0.0
    %97 = vmatprep.subr.mxu0 0.0
    %98 = vmatpush2.msra.mxu0 0.0
    %99 = vmatprep.subr.mxu0 0.0
    %100 = vmatpush2.msra.mxu0 0.0
    %101 = vmatprep.subr.mxu0 0.0
    %102 = vmatpush2.msra.mxu0 0.0
    %103 = vmatprep.subr.mxu0 0.0
    %104 = vmatpush2.msra.mxu0 0.0
    %105 = vmatprep.subr.mxu0 0.0
    %106 = vmatpush2.msra.mxu0 0.0
    %107 = vmatprep.mubr.f32.mxu0 0.0
    %108 = vmatmul.mubr.f32.gmra.mxu0 %v34
    %v109 = vpop.f32.mrf.mxu0
    %v110 = vadd.f32 0.0, %v109
    %v111 = vpop.f32.mrf.mxu0
    %112 = vmatprep.mubr.f32.mxu0 0.0
    %113 = vmatmul.mubr.f32.gmra.mxu0 %v37
    %v114 = vpop.f32.mrf.mxu0
    %v115 = vadd.f32 0.0, %v114
    %v116 = vpop.f32.mrf.mxu0
    %117 = vdwg.mxu0
    %vm118 = vcmask 130048
    %119 = vst.msk [vmem:[#allocation2] sm:$0xff] %vm118, %v110
    %120 = vst.msk [vmem:[#allocation2 + $0x8] sm:$0xff] %vm118, %v115
    %v121 = vld [vmem:[#allocation3] sm:$0xff]
    %v122 = vld [vmem:[#allocation3 + $0x8] sm:$0xff]
    %v123 = vld [vmem:[#allocation2] sm:$0xff]
    %v124 = vld [vmem:[#allocation2 + $0x8] sm:$0xff]
    %v126 = vsel %vm118, %v123, 0
    %v129 = vsel %vm118, %v124, 0
    %131 = vmatprep.subr.mxu0 0.0
    %132 = vmatpush1.msra.mxu0 0.0
    %133 = vmatprep.subr.mxu0 0.0
    %134 = vmatpush1.msra.mxu0 0.0
    %135 = vmatprep.subr.mxu0 0.0
    %136 = vmatpush1.msra.mxu0 0.0
    %137 = vmatprep.subr.mxu0 0.0
    %138 = vmatpush1.msra.mxu0 0.0
    %139 = vmatprep.subr.mxu0 0.0
    %140 = vmatpush1.msra.mxu0 0.0
    %141 = vmatprep.subr.mxu0 0.0
    %142 = vmatpush1.msra.mxu0 0.0
    %143 = vmatprep.subr.mxu0 0.0
    %144 = vmatpush1.msra.mxu0 0.0
    %145 = vmatprep.subr.mxu0 0.0
    %146 = vmatpush1.msra.mxu0 0.0
    %147 = vmatprep.subr.mxu0 0.0
    %148 = vmatpush1.msra.mxu0 0.0
    %149 = vmatprep.subr.mxu0 0.0
    %150 = vmatpush1.msra.mxu0 0.0
    %151 = vmatprep.subr.mxu0 0.0
    %152 = vmatpush1.msra.mxu0 0.0
    %153 = vmatprep.subr.mxu0 0.0
    %154 = vmatpush1.msra.mxu0 0.0
    %155 = vmatprep.subr.mxu0 0.0
    %156 = vmatpush1.msra.mxu0 0.0
    %157 = vmatprep.subr.mxu0 0.0
    %158 = vmatpush1.msra.mxu0 0.0
    %159 = vmatprep.subr.mxu0 0.0
    %160 = vmatpush1.msra.mxu0 %v28
    %161 = vmatprep.subr.mxu0 0.0
    %162 = vmatpush1.msra.mxu0 %v27
    %163 = vmatprep.subr.mxu0 0.0
    %164 = vmatpush2.msra.mxu0 0.0
    %165 = vmatprep.subr.mxu0 0.0
    %166 = vmatpush2.msra.mxu0 0.0
    %167 = vmatprep.subr.mxu0 0.0
    %168 = vmatpush2.msra.mxu0 0.0
    %169 = vmatprep.subr.mxu0 0.0
    %170 = vmatpush2.msra.mxu0 0.0
    %171 = vmatprep.subr.mxu0 0.0
    %172 = vmatpush2.msra.mxu0 0.0
    %173 = vmatprep.subr.mxu0 0.0
    %174 = vmatpush2.msra.mxu0 0.0
    %175 = vmatprep.subr.mxu0 0.0
    %176 = vmatpush2.msra.mxu0 0.0
    %177 = vmatprep.subr.mxu0 0.0
    %178 = vmatpush2.msra.mxu0 0.0
    %179 = vmatprep.subr.mxu0 0.0
    %180 = vmatpush2.msra.mxu0 0.0
    %181 = vmatprep.subr.mxu0 0.0
    %182 = vmatpush2.msra.mxu0 0.0
    %183 = vmatprep.subr.mxu0 0.0
    %184 = vmatpush2.msra.mxu0 0.0
    %185 = vmatprep.subr.mxu0 0.0
    %186 = vmatpush2.msra.mxu0 0.0
    %187 = vmatprep.subr.mxu0 0.0
    %188 = vmatpush2.msra.mxu0 0.0
    %189 = vmatprep.subr.mxu0 0.0
    %190 = vmatpush2.msra.mxu0 0.0
    %191 = vmatprep.subr.mxu0 0.0
    %192 = vmatpush2.msra.mxu0 0.0
    %193 = vmatprep.subr.mxu0 0.0
    %194 = vmatpush2.msra.mxu0 0.0
    %195 = vmatprep.mubr.f32.mxu0 0.0
    %196 = vmatmul.mubr.f32.gmra.mxu0 %v126
    %v197 = vpop.f32.mrf.mxu0
    %v198 = vadd.f32 0.0, %v197
    %v199 = vpop.f32.mrf.mxu0
    %200 = vmatprep.mubr.f32.mxu0 0.0
    %201 = vmatmul.mubr.f32.gmra.mxu0 %v129
    %v202 = vpop.f32.mrf.mxu0
    %v203 = vadd.f32 0.0, %v202
    %v204 = vpop.f32.mrf.mxu0
    %205 = vdwg.mxu0
    %v206 = vadd.f32 %v121, %v198
    %v207 = vadd.f32 %v122, %v203
    %208 = vst [vmem:[#allocation3] sm:$0xff] %v206
    %209 = vst [vmem:[#allocation3 + $0x8] sm:$0xff] %v207
    %s210 = scalar_lea.vmem %s0, 24
    %v211 = vld [vmem:[%s210] sm:$0xff]
    %v212 = vld [vmem:[%s210 + $0x8] sm:$0xff]
    %v213 = vld [vmem:[%s210 + $0x10] sm:$0xf]
    %v215 = vsel %vm39, %v213, 0
    %217 = vmatprep.subr.mxu0 0.0
    %218 = vmatpush1.msra.mxu0 0.0
    %219 = vmatprep.subr.mxu0 0.0
    %220 = vmatpush1.msra.mxu0 0.0
    %221 = vmatprep.subr.mxu0 0.0
    %222 = vmatpush1.msra.mxu0 0.0
    %223 = vmatprep.subr.mxu0 0.0
    %224 = vmatpush1.msra.mxu0 0.0
    %225 = vmatprep.subr.mxu0 0.0
    %226 = vmatpush1.msra.mxu0 0.0
    %227 = vmatprep.subr.mxu0 0.0
    %228 = vmatpush1.msra.mxu0 0.0
    %229 = vmatprep.subr.mxu0 0.0
    %230 = vmatpush1.msra.mxu0 0.0
    %231 = vmatprep.subr.mxu0 0.0
    %232 = vmatpush1.msra.mxu0 0.0
    %233 = vmatprep.subr.mxu0 0.0
    %234 = vmatpush1.msra.mxu0 0.0
    %235 = vmatprep.subr.mxu0 0.0
    %236 = vmatpush1.msra.mxu0 0.0
    %237 = vmatprep.subr.mxu0 0.0
    %238 = vmatpush1.msra.mxu0 0.0
    %239 = vmatprep.subr.mxu0 0.0
    %240 = vmatpush1.msra.mxu0 0.0
    %241 = vmatprep.subr.mxu0 0.0
    %242 = vmatpush1.msra.mxu0 0.0
    %243 = vmatprep.subr.mxu0 0.0
    %244 = vmatpush1.msra.mxu0 %v215
    %245 = vmatprep.subr.mxu0 0.0
    %246 = vmatpush1.msra.mxu0 %v212
    %247 = vmatprep.subr.mxu0 0.0
    %248 = vmatpush1.msra.mxu0 %v211
    %249 = vmatprep.subr.mxu0 0.0
    %250 = vmatpush2.msra.mxu0 0.0
    %251 = vmatprep.subr.mxu0 0.0
    %252 = vmatpush2.msra.mxu0 0.0
    %253 = vmatprep.subr.mxu0 0.0
    %254 = vmatpush2.msra.mxu0 0.0
    %255 = vmatprep.subr.mxu0 0.0
    %256 = vmatpush2.msra.mxu0 0.0
    %257 = vmatprep.subr.mxu0 0.0
    %258 = vmatpush2.msra.mxu0 0.0
    %259 = vmatprep.subr.mxu0 0.0
    %260 = vmatpush2.msra.mxu0 0.0
    %261 = vmatprep.subr.mxu0 0.0
    %262 = vmatpush2.msra.mxu0 0.0
    %263 = vmatprep.subr.mxu0 0.0
    %264 = vmatpush2.msra.mxu0 0.0
    %265 = vmatprep.subr.mxu0 0.0
    %266 = vmatpush2.msra.mxu0 0.0
    %267 = vmatprep.subr.mxu0 0.0
    %268 = vmatpush2.msra.mxu0 0.0
    %269 = vmatprep.subr.mxu0 0.0
    %270 = vmatpush2.msra.mxu0 0.0
    %271 = vmatprep.subr.mxu0 0.0
    %272 = vmatpush2.msra.mxu0 0.0
    %273 = vmatprep.subr.mxu0 0.0
    %274 = vmatpush2.msra.mxu0 0.0
    %275 = vmatprep.subr.mxu0 0.0
    %276 = vmatpush2.msra.mxu0 0.0
    %277 = vmatprep.subr.mxu0 0.0
    %278 = vmatpush2.msra.mxu0 0.0
    %279 = vmatprep.subr.mxu0 0.0
    %280 = vmatpush2.msra.mxu0 0.0
    %281 = vmatprep.mubr.f32.mxu0 0.0
    %282 = vmatmul.mubr.f32.gmra.mxu0 %v34
    %v283 = vpop.f32.mrf.mxu0
    %v284 = vadd.f32 0.0, %v283
    %v285 = vpop.f32.mrf.mxu0
    %286 = vmatprep.mubr.f32.mxu0 0.0
    %287 = vmatmul.mubr.f32.gmra.mxu0 %v37
    %v288 = vpop.f32.mrf.mxu0
    %v289 = vadd.f32 0.0, %v288
    %v290 = vpop.f32.mrf.mxu0
    %291 = vdwg.mxu0
    %292 = vst.msk [vmem:[#allocation2] sm:$0xff] %vm118, %v284
    %293 = vst.msk [vmem:[#allocation2 + $0x8] sm:$0xff] %vm118, %v289
    %s294 = scalar_lea.vmem [#allocation3], 16
    %v295 = vld [vmem:[%s294] sm:$0xff]
    %v296 = vld [vmem:[%s294 + $0x8] sm:$0xff]
    %v297 = vld [vmem:[#allocation2] sm:$0xff]
    %v298 = vld [vmem:[#allocation2 + $0x8] sm:$0xff]
    %v300 = vsel %vm118, %v297, 0
    %v303 = vsel %vm118, %v298, 0
    %305 = vmatprep.subr.mxu0 0.0
    %306 = vmatpush1.msra.mxu0 0.0
    %307 = vmatprep.subr.mxu0 0.0
    %308 = vmatpush1.msra.mxu0 0.0
    %309 = vmatprep.subr.mxu0 0.0
    %310 = vmatpush1.msra.mxu0 0.0
    %311 = vmatprep.subr.mxu0 0.0
    %312 = vmatpush1.msra.mxu0 0.0
    %313 = vmatprep.subr.mxu0 0.0
    %314 = vmatpush1.msra.mxu0 0.0
    %315 = vmatprep.subr.mxu0 0.0
    %316 = vmatpush1.msra.mxu0 0.0
    %317 = vmatprep.subr.mxu0 0.0
    %318 = vmatpush1.msra.mxu0 0.0
    %319 = vmatprep.subr.mxu0 0.0
    %320 = vmatpush1.msra.mxu0 0.0
    %321 = vmatprep.subr.mxu0 0.0
    %322 = vmatpush1.msra.mxu0 0.0
    %323 = vmatprep.subr.mxu0 0.0
    %324 = vmatpush1.msra.mxu0 0.0
    %325 = vmatprep.subr.mxu0 0.0
    %326 = vmatpush1.msra.mxu0 0.0
    %327 = vmatprep.subr.mxu0 0.0
    %328 = vmatpush1.msra.mxu0 0.0
    %329 = vmatprep.subr.mxu0 0.0
    %330 = vmatpush1.msra.mxu0 0.0
    %331 = vmatprep.subr.mxu0 0.0
    %332 = vmatpush1.msra.mxu0 0.0
    %333 = vmatprep.subr.mxu0 0.0
    %334 = vmatpush1.msra.mxu0 %v28
    %335 = vmatprep.subr.mxu0 0.0
    %336 = vmatpush1.msra.mxu0 %v27
    %337 = vmatprep.subr.mxu0 0.0
    %338 = vmatpush2.msra.mxu0 0.0
    %339 = vmatprep.subr.mxu0 0.0
    %340 = vmatpush2.msra.mxu0 0.0
    %341 = vmatprep.subr.mxu0 0.0
    %342 = vmatpush2.msra.mxu0 0.0
    %343 = vmatprep.subr.mxu0 0.0
    %344 = vmatpush2.msra.mxu0 0.0
    %345 = vmatprep.subr.mxu0 0.0
    %346 = vmatpush2.msra.mxu0 0.0
    %347 = vmatprep.subr.mxu0 0.0
    %348 = vmatpush2.msra.mxu0 0.0
    %349 = vmatprep.subr.mxu0 0.0
    %350 = vmatpush2.msra.mxu0 0.0
    %351 = vmatprep.subr.mxu0 0.0
    %352 = vmatpush2.msra.mxu0 0.0
    %353 = vmatprep.subr.mxu0 0.0
    %354 = vmatpush2.msra.mxu0 0.0
    %355 = vmatprep.subr.mxu0 0.0
    %356 = vmatpush2.msra.mxu0 0.0
    %357 = vmatprep.subr.mxu0 0.0
    %358 = vmatpush2.msra.mxu0 0.0
    %359 = vmatprep.subr.mxu0 0.0
    %360 = vmatpush2.msra.mxu0 0.0
    %361 = vmatprep.subr.mxu0 0.0
    %362 = vmatpush2.msra.mxu0 0.0
    %363 = vmatprep.subr.mxu0 0.0
    %364 = vmatpush2.msra.mxu0 0.0
    %365 = vmatprep.subr.mxu0 0.0
    %366 = vmatpush2.msra.mxu0 0.0
    %367 = vmatprep.subr.mxu0 0.0
    %368 = vmatpush2.msra.mxu0 0.0
    %369 = vmatprep.mubr.f32.mxu0 0.0
    %370 = vmatmul.mubr.f32.gmra.mxu0 %v300
    %v371 = vpop.f32.mrf.mxu0
    %v372 = vadd.f32 0.0, %v371
    %v373 = vpop.f32.mrf.mxu0
    %374 = vmatprep.mubr.f32.mxu0 0.0
    %375 = vmatmul.mubr.f32.gmra.mxu0 %v303
    %v376 = vpop.f32.mrf.mxu0
    %v377 = vadd.f32 0.0, %v376
    %v378 = vpop.f32.mrf.mxu0
    %379 = vdwg.mxu0
    %v380 = vadd.f32 %v295, %v372
    %v381 = vadd.f32 %v296, %v377
    %382 = vst [vmem:[%s294] sm:$0xff] %v380
    %383 = vst [vmem:[%s294 + $0x8] sm:$0xff] %v381
    %s384 = scalar_lea.vmem %s0, 48
    %v385 = vld [vmem:[%s384] sm:$0xff]
    %v386 = vld [vmem:[%s384 + $0x8] sm:$0xff]
    %v387 = vld [vmem:[%s384 + $0x10] sm:$0xf]
    %v389 = vsel %vm39, %v387, 0
    %391 = vmatprep.subr.mxu0 0.0
    %392 = vmatpush1.msra.mxu0 0.0
    %393 = vmatprep.subr.mxu0 0.0
    %394 = vmatpush1.msra.mxu0 0.0
    %395 = vmatprep.subr.mxu0 0.0
    %396 = vmatpush1.msra.mxu0 0.0
    %397 = vmatprep.subr.mxu0 0.0
    %398 = vmatpush1.msra.mxu0 0.0
    %399 = vmatprep.subr.mxu0 0.0
    %400 = vmatpush1.msra.mxu0 0.0
    %401 = vmatprep.subr.mxu0 0.0
    %402 = vmatpush1.msra.mxu0 0.0
    %403 = vmatprep.subr.mxu0 0.0
    %404 = vmatpush1.msra.mxu0 0.0
    %405 = vmatprep.subr.mxu0 0.0
    %406 = vmatpush1.msra.mxu0 0.0
    %407 = vmatprep.subr.mxu0 0.0
    %408 = vmatpush1.msra.mxu0 0.0
    %409 = vmatprep.subr.mxu0 0.0
    %410 = vmatpush1.msra.mxu0 0.0
    %411 = vmatprep.subr.mxu0 0.0
    %412 = vmatpush1.msra.mxu0 0.0
    %413 = vmatprep.subr.mxu0 0.0
    %414 = vmatpush1.msra.mxu0 0.0
    %415 = vmatprep.subr.mxu0 0.0
    %416 = vmatpush1.msra.mxu0 0.0
    %417 = vmatprep.subr.mxu0 0.0
    %418 = vmatpush1.msra.mxu0 %v389
    %419 = vmatprep.subr.mxu0 0.0
    %420 = vmatpush1.msra.mxu0 %v386
    %421 = vmatprep.subr.mxu0 0.0
    %422 = vmatpush1.msra.mxu0 %v385
    %423 = vmatprep.subr.mxu0 0.0
    %424 = vmatpush2.msra.mxu0 0.0
    %425 = vmatprep.subr.mxu0 0.0
    %426 = vmatpush2.msra.mxu0 0.0
    %427 = vmatprep.subr.mxu0 0.0
    %428 = vmatpush2.msra.mxu0 0.0
    %429 = vmatprep.subr.mxu0 0.0
    %430 = vmatpush2.msra.mxu0 0.0
    %431 = vmatprep.subr.mxu0 0.0
    %432 = vmatpush2.msra.mxu0 0.0
    %433 = vmatprep.subr.mxu0 0.0
    %434 = vmatpush2.msra.mxu0 0.0
    %435 = vmatprep.subr.mxu0 0.0
    %436 = vmatpush2.msra.mxu0 0.0
    %437 = vmatprep.subr.mxu0 0.0
    %438 = vmatpush2.msra.mxu0 0.0
    %439 = vmatprep.subr.mxu0 0.0
    %440 = vmatpush2.msra.mxu0 0.0
    %441 = vmatprep.subr.mxu0 0.0
    %442 = vmatpush2.msra.mxu0 0.0
    %443 = vmatprep.subr.mxu0 0.0
    %444 = vmatpush2.msra.mxu0 0.0
    %445 = vmatprep.subr.mxu0 0.0
    %446 = vmatpush2.msra.mxu0 0.0
    %447 = vmatprep.subr.mxu0 0.0
    %448 = vmatpush2.msra.mxu0 0.0
    %449 = vmatprep.subr.mxu0 0.0
    %450 = vmatpush2.msra.mxu0 0.0
    %451 = vmatprep.subr.mxu0 0.0
    %452 = vmatpush2.msra.mxu0 0.0
    %453 = vmatprep.subr.mxu0 0.0
    %454 = vmatpush2.msra.mxu0 0.0
    %455 = vmatprep.mubr.f32.mxu0 0.0
    %456 = vmatmul.mubr.f32.gmra.mxu0 %v34
    %v457 = vpop.f32.mrf.mxu0
    %v458 = vadd.f32 0.0, %v457
    %v459 = vpop.f32.mrf.mxu0
    %460 = vmatprep.mubr.f32.mxu0 0.0
    %461 = vmatmul.mubr.f32.gmra.mxu0 %v37
    %v462 = vpop.f32.mrf.mxu0
    %v463 = vadd.f32 0.0, %v462
    %v464 = vpop.f32.mrf.mxu0
    %465 = vdwg.mxu0
    %466 = vst.msk [vmem:[#allocation2] sm:$0xff] %vm118, %v458
    %467 = vst.msk [vmem:[#allocation2 + $0x8] sm:$0xff] %vm118, %v463
    %s468 = scalar_lea.vmem [#allocation3], 32
    %v469 = vld [vmem:[%s468] sm:$0xff]
    %v470 = vld [vmem:[%s468 + $0x8] sm:$0xff]
    %v471 = vld [vmem:[#allocation2] sm:$0xff]
    %v472 = vld [vmem:[#allocation2 + $0x8] sm:$0xff]
    %v474 = vsel %vm118, %v471, 0
    %v477 = vsel %vm118, %v472, 0
    %479 = vmatprep.subr.mxu0 0.0
    %480 = vmatpush1.msra.mxu0 0.0
    %481 = vmatprep.subr.mxu0 0.0
    %482 = vmatpush1.msra.mxu0 0.0
    %483 = vmatprep.subr.mxu0 0.0
    %484 = vmatpush1.msra.mxu0 0.0
    %485 = vmatprep.subr.mxu0 0.0
    %486 = vmatpush1.msra.mxu0 0.0
    %487 = vmatprep.subr.mxu0 0.0
    %488 = vmatpush1.msra.mxu0 0.0
    %489 = vmatprep.subr.mxu0 0.0
    %490 = vmatpush1.msra.mxu0 0.0
    %491 = vmatprep.subr.mxu0 0.0
    %492 = vmatpush1.msra.mxu0 0.0
    %493 = vmatprep.subr.mxu0 0.0
    %494 = vmatpush1.msra.mxu0 0.0
    %495 = vmatprep.subr.mxu0 0.0
    %496 = vmatpush1.msra.mxu0 0.0
    %497 = vmatprep.subr.mxu0 0.0
    %498 = vmatpush1.msra.mxu0 0.0
    %499 = vmatprep.subr.mxu0 0.0
    %500 = vmatpush1.msra.mxu0 0.0
    %501 = vmatprep.subr.mxu0 0.0
    %502 = vmatpush1.msra.mxu0 0.0
    %503 = vmatprep.subr.mxu0 0.0
    %504 = vmatpush1.msra.mxu0 0.0
    %505 = vmatprep.subr.mxu0 0.0
    %506 = vmatpush1.msra.mxu0 0.0
    %507 = vmatprep.subr.mxu0 0.0
    %508 = vmatpush1.msra.mxu0 %v28
    %509 = vmatprep.subr.mxu0 0.0
    %510 = vmatpush1.msra.mxu0 %v27
    %511 = vmatprep.subr.mxu0 0.0
    %512 = vmatpush2.msra.mxu0 0.0
    %513 = vmatprep.subr.mxu0 0.0
    %514 = vmatpush2.msra.mxu0 0.0
    %515 = vmatprep.subr.mxu0 0.0
    %516 = vmatpush2.msra.mxu0 0.0
    %517 = vmatprep.subr.mxu0 0.0
    %518 = vmatpush2.msra.mxu0 0.0
    %519 = vmatprep.subr.mxu0 0.0
    %520 = vmatpush2.msra.mxu0 0.0
    %521 = vmatprep.subr.mxu0 0.0
    %522 = vmatpush2.msra.mxu0 0.0
    %523 = vmatprep.subr.mxu0 0.0
    %524 = vmatpush2.msra.mxu0 0.0
    %525 = vmatprep.subr.mxu0 0.0
    %526 = vmatpush2.msra.mxu0 0.0
    %527 = vmatprep.subr.mxu0 0.0
    %528 = vmatpush2.msra.mxu0 0.0
    %529 = vmatprep.subr.mxu0 0.0
    %530 = vmatpush2.msra.mxu0 0.0
    %531 = vmatprep.subr.mxu0 0.0
    %532 = vmatpush2.msra.mxu0 0.0
    %533 = vmatprep.subr.mxu0 0.0
    %534 = vmatpush2.msra.mxu0 0.0
    %535 = vmatprep.subr.mxu0 0.0
    %536 = vmatpush2.msra.mxu0 0.0
    %537 = vmatprep.subr.mxu0 0.0
    %538 = vmatpush2.msra.mxu0 0.0
    %539 = vmatprep.subr.mxu0 0.0
    %540 = vmatpush2.msra.mxu0 0.0
    %541 = vmatprep.subr.mxu0 0.0
    %542 = vmatpush2.msra.mxu0 0.0
    %543 = vmatprep.mubr.f32.mxu0 0.0
    %544 = vmatmul.mubr.f32.gmra.mxu0 %v474
    %v545 = vpop.f32.mrf.mxu0
    %v546 = vadd.f32 0.0, %v545
    %v547 = vpop.f32.mrf.mxu0
    %548 = vmatprep.mubr.f32.mxu0 0.0
    %549 = vmatmul.mubr.f32.gmra.mxu0 %v477
    %v550 = vpop.f32.mrf.mxu0
    %v551 = vadd.f32 0.0, %v550
    %v552 = vpop.f32.mrf.mxu0
    %553 = vdwg.mxu0
    %v554 = vadd.f32 %v469, %v546
    %v555 = vadd.f32 %v470, %v551
    %556 = vst [vmem:[%s468] sm:$0xff] %v554
    %557 = vst [vmem:[%s468 + $0x8] sm:$0xff] %v555
    // Predicated region
    $region18: #{tpu_custom_call.1} parent=1 // pred_check
      _
    $region19: #{tpu_custom_call.1} parent=1 // pred_check_branch
      %559 = sbr.rel (0) target = $region21
    $region20: #{tpu_custom_call.1} parent=1 // pred_region
      %s561 = ssub.s32 768, 768
      %562 = vsyncadd [#allocation4], %s561
      %s563 = sshll.u32 [#allocation3], 4
      %s564 = int_to_ptr.vmem [resolvable:$true] %s563
      %569 = dma.vmem_to_hbm [thread:$0]  %s564, 768, %s3, [#allocation4], 128, 128, 8
    $region21: #{tpu_custom_call.1} parent=1 // pred_fallthru
      _
    // Predicated region
    $region22: #{tpu_custom_call.1} parent=1 // pred_check
      _
    $region23: #{tpu_custom_call.1} parent=1 // pred_check_branch
      %571 = sbr.rel (0) target = $region25
    $region24: #{tpu_custom_call.1} parent=1 // pred_region
      %572 = dma.done [#allocation4], 768
    $region25: #{tpu_custom_call.1} parent=1 // pred_fallthru
      _
    %573 = vsyncpa [#allocation4], 1

</llo_original>
